<compile_context>
chip_gen: v6e
topology: v6e:2x2x1
jax: 0.10.0
libtpu: 0.0.40
codegen_flags: <defaults>
</compile_context>

<pallas_src>
import math

import jax
import jax.numpy as jnp
from jax.experimental import pallas as pl
from jax.experimental.pallas import tpu as pltpu


def _round_up(x, m):
    return ((x + m - 1) // m) * m


# --------------------------------------------------------------------------
# Stage 1: support = X @ W, tiled over node rows.
# --------------------------------------------------------------------------
def _support_kernel(x_ref, w_ref, out_ref):
    out_ref[...] = jnp.dot(
        x_ref[...], w_ref[...], preferred_element_type=jnp.float32
    ).astype(out_ref.dtype)


# --------------------------------------------------------------------------
# Stage 2: out = adj @ support + bias, (row-tile x K-tile) grid with
# an f32 accumulator resident across the K (arbitrary) axis.
# --------------------------------------------------------------------------
def _aggregate_kernel(adj_ref, s_ref, b_ref, out_ref, acc_ref):
    k = pl.program_id(1)

    @pl.when(k == 0)
    def _():
        acc_ref[...] = jnp.zeros_like(acc_ref)

    acc_ref[...] += jnp.dot(
        adj_ref[...], s_ref[...], preferred_element_type=jnp.float32
    )

    @pl.when(k == pl.num_programs(1) - 1)
    def _():
        # Bias add only once, in the epilogue.
        out_ref[...] = (acc_ref[...] + b_ref[...]).astype(out_ref.dtype)


def graph_convolution(x, adj, weight, bias=None, *, tm=256, tk=512,
                      use_bf16=False):
    """Fused GCN forward: adj @ (x @ weight) + bias.

    x:      (N, F_in)     float32
    adj:    (N, N)        float32 (dense)
    weight: (F_in, F_out) float32
    bias:   (F_out,)      float32 or None
    returns (N, F_out)    float32
    """
    n, f_in = x.shape
    f_out = weight.shape[1]

    # Lane-dense feature dims (multiples of 128) and node padding so the
    # adjacency tiles evenly into (tm, tk) blocks.
    f_in_p = _round_up(f_in, 128)
    f_out_p = _round_up(f_out, 128)

    nr = _round_up(n, 128)
    tm = min(tm, nr)
    tk = min(tk, nr)
    tk = _round_up(tk, tm)        # tk is a multiple of tm -> single pad size
    n_p = _round_up(n, tk)

    cdtype = jnp.bfloat16 if use_bf16 else jnp.float32

    x_p = jnp.zeros((n_p, f_in_p), cdtype).at[:n, :f_in].set(x.astype(cdtype))
    w_p = jnp.zeros((f_in_p, f_out_p), cdtype).at[:f_in, :f_out].set(
        weight.astype(cdtype))
    adj_p = jnp.zeros((n_p, n_p), cdtype).at[:n, :n].set(adj.astype(cdtype))
    if bias is None:
        b_p = jnp.zeros((1, f_out_p), jnp.float32)
    else:
        b_p = jnp.zeros((1, f_out_p), jnp.float32).at[0, :f_out].set(
            bias.astype(jnp.float32))

    vmem_limit = 48 * 1024 * 1024  # safe under v7x's 64 MiB physical VMEM

    # ---------------- Stage 1: support = X @ W ----------------
    support = pl.pallas_call(
        _support_kernel,
        out_shape=jax.ShapeDtypeStruct((n_p, f_out_p), cdtype),
        grid_spec=pltpu.PrefetchScalarGridSpec(
            num_scalar_prefetch=0,
            grid=(n_p // tm,),
            in_specs=[
                pl.BlockSpec((tm, f_in_p), lambda i: (i, 0)),
                pl.BlockSpec((f_in_p, f_out_p), lambda i: (0, 0)),
            ],
            out_specs=pl.BlockSpec((tm, f_out_p), lambda i: (i, 0)),
        ),
        compiler_params=pltpu.CompilerParams(
            dimension_semantics=("parallel",),
            vmem_limit_bytes=vmem_limit,
        ),
    )(x_p, w_p)

    # ---------------- Stage 2: out = adj @ support + bias ----------------
    out_p = pl.pallas_call(
        _aggregate_kernel,
        out_shape=jax.ShapeDtypeStruct((n_p, f_out_p), jnp.float32),
        grid_spec=pltpu.PrefetchScalarGridSpec(
            num_scalar_prefetch=0,
            grid=(n_p // tm, n_p // tk),
            in_specs=[
                pl.BlockSpec((tm, tk), lambda i, k: (i, k)),        # adj tile
                pl.BlockSpec((tk, f_out_p), lambda i, k: (k, 0)),   # support
                pl.BlockSpec((1, f_out_p), lambda i, k: (0, 0)),    # bias
            ],
            out_specs=pl.BlockSpec((tm, f_out_p), lambda i, k: (i, 0)),
            scratch_shapes=[pltpu.VMEM((tm, f_out_p), jnp.float32)],
        ),
        compiler_params=pltpu.CompilerParams(
            dimension_semantics=("parallel", "arbitrary"),
            vmem_limit_bytes=vmem_limit,
        ),
    )(adj_p, support, b_p)

    # Slice off node / feature padding.
    return out_p[:n, :f_out]


if __name__ == "__main__":
    # Small, module-consistent shapes: N nodes, in_features -> out_features.
    # Chosen so that (with tm=128, tk=256) the grid has multiple row tiles AND
    # a multi-step K reduction, exercising the accumulator/epilogue path.
    N, F_IN, F_OUT = 300, 48, 96

    key = jax.random.PRNGKey(0)
    k_w, k_b, k_x, k_a = jax.random.split(key, 4)

    # Deterministic parameter init mirroring reset_parameters():
    # uniform(-stdv, stdv) with stdv = 1/sqrt(out_features).
    stdv = 1.0 / math.sqrt(F_OUT)
    weight = jax.random.uniform(k_w, (F_IN, F_OUT), jnp.float32, -stdv, stdv)
    bias = jax.random.uniform(k_b, (F_OUT,), jnp.float32, -stdv, stdv)

    # Example inputs.
    x = jax.random.normal(k_x, (N, F_IN), jnp.float32)
    adj = jax.random.uniform(k_a, (N, N), jnp.float32)  # dense "adjacency"

    out = graph_convolution(x, adj, weight, bias, tm=128, tk=256)
    out = jax.block_until_ready(out)

    # Correctness check against a full-precision plain-JAX reference.
    ref = jnp.dot(adj, jnp.dot(x, weight, precision="highest"),
                  precision="highest") + bias
    assert out.shape == (N, F_OUT)
    assert jnp.allclose(out, ref, atol=1e-3, rtol=1e-3), float(
        jnp.max(jnp.abs(out - ref)))

    print("KERNEL_OK")
</pallas_src>

<mosaic_0001>
module attributes {stable_mosaic.version = 11 : i64} {
  func.func @_support_kernel(%arg0: i32, %arg1: memref<128x128xf32, #tpu.memory_space<vmem>>, %arg2: memref<128x128xf32, #tpu.memory_space<vmem>>, %arg3: memref<128x128xf32, #tpu.memory_space<vmem>>) attributes {dimension_semantics = [#tpu.dimension_semantics<parallel>], iteration_bounds = array<i64: 4>, scalar_prefetch = 0 : i64, scratch_operands = 0 : i64, tpu.core_type = #tpu.core_type<tc>, window_params = [{transform_indices = @transform_0, window_bounds = array<i64: 128, 128>}, {pipeline_mode = #tpu.pipeline_mode<synchronous>, transform_indices = @transform_1, window_bounds = array<i64: 128, 128>}, {transform_indices = @transform_2, window_bounds = array<i64: 128, 128>}]} {
    %c0 = arith.constant 0 : index
    %c0_0 = arith.constant 0 : index
    %0 = vector.load %arg1[%c0, %c0_0] : memref<128x128xf32, #tpu.memory_space<vmem>>, vector<128x128xf32>
    %c0_1 = arith.constant 0 : index
    %c0_2 = arith.constant 0 : index
    %1 = vector.load %arg2[%c0_1, %c0_2] : memref<128x128xf32, #tpu.memory_space<vmem>>, vector<128x128xf32>
    %cst = arith.constant dense<0.000000e+00> : vector<128x128xf32>
    %2 = tpu.matmul %0, %1, %cst {dimension_numbers = #tpu.dot_dimension_numbers<[1], [0], [0], [1], [0, 0, 1, 1], [], []>} : vector<128x128xf32>, vector<128x128xf32>, vector<128x128xf32> -> vector<128x128xf32>
    %c0_3 = arith.constant 0 : index
    %c0_4 = arith.constant 0 : index
    %3 = vector.load %arg3[%c0_3, %c0_4] : memref<128x128xf32, #tpu.memory_space<vmem>>, vector<128x128xf32>
    tpu.vector_store %arg3[%c0_3, %c0_4], %2 {strides = array<i32>} : memref<128x128xf32, #tpu.memory_space<vmem>>, vector<128x128xf32>,
    return
  }
  func.func @transform_0(%arg0: i32) -> (i32, i32) {
    %c0_i32 = arith.constant 0 : i32
    %c0_i32_0 = arith.constant 0 : i32
    return %arg0, %c0_i32 : i32, i32
  }
  func.func @transform_1(%arg0: i32) -> (i32, i32) {
    %c0_i32 = arith.constant 0 : i32
    %c0_i32_0 = arith.constant 0 : i32
    %c0_i32_1 = arith.constant 0 : i32
    return %c0_i32, %c0_i32_0 : i32, i32
  }
  func.func @transform_2(%arg0: i32) -> (i32, i32) {
    %c0_i32 = arith.constant 0 : i32
    %c0_i32_0 = arith.constant 0 : i32
    return %arg0, %c0_i32 : i32, i32
  }
}

</mosaic_0001>

<llo_original>
// kernel: tpu_custom_call.1
$region0: #{tpu_custom_call.1}
  #allocation0 [shape = 'u32[]', space=smem, size = 0x4, offset = 0x4, fixed_abs, tag = 'smem constant byte address 0x4 - core index']
  #allocation1 [shape = 'u32[144,128]{1,0:T(1,128)}', space=vmem, size = 0x12000, scoped, tag = 'internal scratch']
  %s0 = inlined_call_operand.hbm [shape: f32[512,128], index: 0, kind: input, shape index: {}]
  %s1 = inlined_call_operand.hbm [shape: f32[128,128], index: 1, kind: input, shape index: {}]
  %s2 = inlined_call_operand.hbm [shape: f32[512,128], index: 2, kind: output, shape index: {}]
  %s3 = sld [smem:[#allocation0]]
  $region49: #{tpu_custom_call.1} parent=0
    _
  %s5 = ssub.s32 1, %s3
  %s6 = scalar_select 0, %s5, %s3
  $region1: #{tpu_custom_call.1} parent=0
    #allocation2 [shape = 'u8[131072]{0}', space=vmem, size = 0x20000, scoped, tag = 'input window, operand 0']
    #allocation3 [shape = 's32[2]{0}', space=sflag, size = 0x8, scoped, tag = 'scoped memory for tpu_custom_call.1']
    #allocation4 [shape = 's32[2]{0}', space=sflag, size = 0x8, scoped, tag = 'scoped memory for tpu_custom_call.1']
    #allocation5 [shape = 'u8[65536]{0}', space=vmem, size = 0x10000, scoped, tag = 'input window, operand 1, single buffered']
    #allocation6 [shape = 's32[1]{0}', space=sflag, size = 0x4, scoped, tag = 'scoped memory for tpu_custom_call.1']
    #allocation7 [shape = 'u8[131072]{0}', space=vmem, size = 0x20000, scoped, tag = 'output window, operand 0']
    %7 = vsyncpa [#allocation3], 0
    %s8 = scalar_lea.sflag [#allocation3], 1
    %9 = vsyncpa %s8, 0
    %10 = vsyncpa [#allocation6], 0
    %11 = vsyncpa [#allocation4], 0
    %s12 = scalar_lea.sflag [#allocation4], 1
    %13 = vsyncpa %s12, 0
    loop: start=0, step=1, limit=6
    $region2: #{tpu_custom_call.1} parent=1 // loop_pre_header
      _
    $region3: #{tpu_custom_call.1} parent=1 // loop_header
      %s15 = sphi 0, %s19
      %p16 = scmp.ge.s32.totalorder %s15, 6
      %s25 = sphi 0, %s27
      %s28 = sphi 0, %s25
      %s29 = sphi 0, %s28
      %s45 = sphi 0, %s29
      %s49 = sphi 0, %s49
      %s51 = sphi 0, %s49
      %s52 = sphi 0, %s51
      %s66 = sphi 0, %s52
      %s72 = sphi 0, %s74
      %s75 = sphi 0, %s72
      %s76 = sphi 0, %s75
      %s92 = sphi 0, %s76
    $region4: #{tpu_custom_call.1} parent=1 // loop_header_branch
      %18 = sbr.rel (%p16) target = $region8
    $region5: #{tpu_custom_call.1} parent=1 // loop_body
      %s20 = ssub.s32 %s15, 1
      %s21 = ssub.s32 %s15, 2
      %s22 = sadd.s32 %s15, 1
      %s23 = ssub.s32 %s15, %s22
      %p24 = scmp.eq.s32.totalorder %s23, 0
      %s26 = sadd.s32 %s25, 1
      %s27 = scalar_select %p24, %s25, %s26
      %p30 = pneg %p24
      %p31 = scmp.eq.s32.totalorder %s15, 3
      %p32 = por %p30, %p31
      %p33 = scmp.ne.s32.totalorder %s25, %s28
      %p34 = scmp.eq.s32.totalorder %s15, 0
      %p35 = por %p33, %p34
      %p36 = scmp.ne.s32.totalorder %s25, %s28
      %p37 = scmp.eq.s32.totalorder %s20, 3
      %p38 = por %p36, %p37
      %p39 = scmp.ne.s32.totalorder %s28, %s29
      %p40 = scmp.eq.s32.totalorder %s20, 0
      %p41 = por %p39, %p40
      %p42 = scmp.ne.s32.totalorder %s28, %s29
      %p43 = scmp.eq.s32.totalorder %s21, 3
      %p44 = por %p42, %p43
      %p46 = scmp.ne.s32.totalorder %s29, %s45
      %p47 = scmp.eq.s32.totalorder %s21, 0
      %p48 = por %p46, %p47
      %s50 = sadd.s32 %s49, 1
      %p53 = scmp.eq.s32.totalorder %s15, 3
      %p54 = scmp.ne.s32.totalorder %s49, %s51
      %p55 = scmp.eq.s32.totalorder %s15, 0
      %p56 = por %p54, %p55
      %p57 = scmp.ne.s32.totalorder %s49, %s51
      %p58 = scmp.eq.s32.totalorder %s20, 3
      %p59 = por %p57, %p58
      %p60 = scmp.ne.s32.totalorder %s51, %s52
      %p61 = scmp.eq.s32.totalorder %s20, 0
      %p62 = por %p60, %p61
      %p63 = scmp.ne.s32.totalorder %s51, %s52
      %p64 = scmp.eq.s32.totalorder %s21, 3
      %p65 = por %p63, %p64
      %p67 = scmp.ne.s32.totalorder %s52, %s66
      %p68 = scmp.eq.s32.totalorder %s21, 0
      %p69 = por %p67, %p68
      %s70 = ssub.s32 %s15, %s22
      %p71 = scmp.eq.s32.totalorder %s70, 0
      %s73 = sadd.s32 %s72, 1
      %s74 = scalar_select %p71, %s72, %s73
      %p77 = pneg %p71
      %p78 = scmp.eq.s32.totalorder %s15, 3
      %p79 = por %p77, %p78
      %p80 = scmp.ne.s32.totalorder %s72, %s75
      %p81 = scmp.eq.s32.totalorder %s15, 0
      %p82 = por %p80, %p81
      %p83 = scmp.ne.s32.totalorder %s72, %s75
      %p84 = scmp.eq.s32.totalorder %s20, 3
      %p85 = por %p83, %p84
      %p86 = scmp.ne.s32.totalorder %s75, %s76
      %p87 = scmp.eq.s32.totalorder %s20, 0
      %p88 = por %p86, %p87
      %p89 = scmp.ne.s32.totalorder %s75, %s76
      %p90 = scmp.eq.s32.totalorder %s21, 3
      %p91 = por %p89, %p90
      %p93 = scmp.ne.s32.totalorder %s76, %s92
      %p94 = scmp.eq.s32.totalorder %s21, 0
      %p95 = por %p93, %p94
      %p96 = scmp.le.s32.totalorder 1, %s15
      %p97 = scmp.lt.s32.totalorder %s15, 5
      %p98 = pnand %p96, %p97
      %p99 = pneg %p98
      // Predicated region
      $region9: #{tpu_custom_call.1} parent=5 // pred_check
        _
      $region10: #{tpu_custom_call.1} parent=5 // pred_check_branch
        %101 = sbr.rel (%p98) target = $region12
      $region11: #{tpu_custom_call.1} parent=5 // pred_region
        %s102 = ssub.s32 %s15, 1
        // Predicated region
        $region13: #{tpu_custom_call.1} parent=11 // pred_check
          %p103 = pneg %p62
        $region14: #{tpu_custom_call.1} parent=11 // pred_check_branch
          %105 = sbr.rel (%p103) target = $region16
        $region15: #{tpu_custom_call.1} parent=11 // pred_region
          %s107 = ssub.s32 2048, 2048
          %108 = vsyncadd [#allocation6], %s107
          %s109 = sshll.u32 [#allocation5], 4
          %s110 = int_to_ptr.vmem [resolvable:$true] %s109
          %115 = dma.hbm_to_vmem [thread:$0]  %s1, 2048, %s110, [#allocation6], 128, 128, 8
        $region16: #{tpu_custom_call.1} parent=11 // pred_fallthru
          _
      $region12: #{tpu_custom_call.1} parent=5 // pred_fallthru
        _
      %p116 = scmp.lt.s32.totalorder %s15, 4
      // Predicated region
      $region17: #{tpu_custom_call.1} parent=5 // pred_check
        %p117 = pneg %p116
      $region18: #{tpu_custom_call.1} parent=5 // pred_check_branch
        %119 = sbr.rel (%p117) target = $region20
      $region19: #{tpu_custom_call.1} parent=5 // pred_region
        // Predicated region
        $region21: #{tpu_custom_call.1} parent=19 // pred_check
          %p120 = pneg %p35
        $region22: #{tpu_custom_call.1} parent=19 // pred_check_branch
          %122 = sbr.rel (%p120) target = $region24
        $region23: #{tpu_custom_call.1} parent=19 // pred_region
          %s123 = sand.u32 %s25, 1
          %s124 = scalar_lea.sflag [#allocation3], %s123
          %s125 = sand.u32 %s25, 1
          %s126 = smul.addr %s125, 128
          %s127 = scalar_lea.vmem [#allocation2], %s126
          %s128 = smul.u32 16, %s15
          %s130 = ssub.s32 2048, 2048
          %131 = vsyncadd %s124, %s130
          %s132 = smul.addr %s128, 128
          %s133 = scalar_lea.hbm %s0, %s132
          %s134 = sshll.u32 %s127, 4
          %s135 = int_to_ptr.vmem [resolvable:$true] %s134
          %140 = dma.hbm_to_vmem [thread:$0]  %s133, 2048, %s135, %s124, 128, 128, 8
        $region24: #{tpu_custom_call.1} parent=19 // pred_fallthru
          _
      $region20: #{tpu_custom_call.1} parent=5 // pred_fallthru
        _
      %p141 = scmp.le.s32.totalorder 1, %s15
      %p142 = scmp.lt.s32.totalorder %s15, 5
      %p143 = pnand %p141, %p142
      %p144 = pneg %p143
      // Predicated region
      $region25: #{tpu_custom_call.1} parent=5 // pred_check
        _
      $region26: #{tpu_custom_call.1} parent=5 // pred_check_branch
        %146 = sbr.rel (%p143) target = $region28
      $region27: #{tpu_custom_call.1} parent=5 // pred_region
        %s147 = ssub.s32 %s15, 1
        %s148 = sand.u32 %s28, 1
        %s149 = scalar_lea.sflag [#allocation3], %s148
        %s150 = sand.u32 %s28, 1
        %s151 = smul.addr %s150, 128
        %s152 = scalar_lea.vmem [#allocation2], %s151
        // Predicated region
        $region29: #{tpu_custom_call.1} parent=27 // pred_check
          %p153 = pneg %p41
        $region30: #{tpu_custom_call.1} parent=27 // pred_check_branch
          %155 = sbr.rel (%p153) target = $region32
        $region31: #{tpu_custom_call.1} parent=27 // pred_region
          %156 = dma.done %s149, 2048
        $region32: #{tpu_custom_call.1} parent=27 // pred_fallthru
          _
        // Predicated region
        $region33: #{tpu_custom_call.1} parent=27 // pred_check
          %p157 = pneg %p62
        $region34: #{tpu_custom_call.1} parent=27 // pred_check_branch
          %159 = sbr.rel (%p157) target = $region36
        $region35: #{tpu_custom_call.1} parent=27 // pred_region
          %160 = dma.done [#allocation6], 2048
        $region36: #{tpu_custom_call.1} parent=27 // pred_fallthru
          _
        %s161 = sand.u32 %s28, 1
        %s162 = scalar_lea.sflag [#allocation3], %s161
        %s163 = sand.u32 %s28, 1
        %s164 = smul.addr %s163, 128
        %s165 = scalar_lea.vmem [#allocation2], %s164
        %p166 = pneg %p41
        %p167 = pneg %p38
        %p168 = pneg %p62
        %p169 = pneg %p59
        %p170 = pneg %p88
        %p171 = pneg %p85
        %s172 = sand.u32 %s75, 1
        %s173 = scalar_lea.sflag [#allocation4], %s172
        %s174 = sand.u32 %s75, 1
        %s175 = smul.addr %s174, 128
        %s176 = scalar_lea.vmem [#allocation7], %s175
        %s177 = smul.u32 16, %s20
        %s178 = smul.u32 16, %s20
        %v179 = vld [vmem:[%s152] sm:$0xff]
        %v180 = vld [vmem:[%s152 + $0x8] sm:$0xff]
        %v181 = vld [vmem:[%s152 + $0x10] sm:$0xff]
        %v182 = vld [vmem:[%s152 + $0x18] sm:$0xff]
        %v183 = vld [vmem:[%s152 + $0x20] sm:$0xff]
        %v184 = vld [vmem:[%s152 + $0x28] sm:$0xff]
        %v185 = vld [vmem:[%s152 + $0x30] sm:$0xff]
        %v186 = vld [vmem:[%s152 + $0x38] sm:$0xff]
        %v187 = vld [vmem:[%s152 + $0x40] sm:$0xff]
        %v188 = vld [vmem:[%s152 + $0x48] sm:$0xff]
        %v189 = vld [vmem:[%s152 + $0x50] sm:$0xff]
        %v190 = vld [vmem:[%s152 + $0x58] sm:$0xff]
        %v191 = vld [vmem:[%s152 + $0x60] sm:$0xff]
        %v192 = vld [vmem:[%s152 + $0x68] sm:$0xff]
        %v193 = vld [vmem:[%s152 + $0x70] sm:$0xff]
        %v194 = vld [vmem:[%s152 + $0x78] sm:$0xff]
        %v195 = vld [vmem:[#allocation5] sm:$0xff]
        %v196 = vld [vmem:[#allocation5 + $0x8] sm:$0xff]
        %v197 = vld [vmem:[#allocation5 + $0x10] sm:$0xff]
        %v198 = vld [vmem:[#allocation5 + $0x18] sm:$0xff]
        %v199 = vld [vmem:[#allocation5 + $0x20] sm:$0xff]
        %v200 = vld [vmem:[#allocation5 + $0x28] sm:$0xff]
        %v201 = vld [vmem:[#allocation5 + $0x30] sm:$0xff]
        %v202 = vld [vmem:[#allocation5 + $0x38] sm:$0xff]
        %v203 = vld [vmem:[#allocation5 + $0x40] sm:$0xff]
        %v204 = vld [vmem:[#allocation5 + $0x48] sm:$0xff]
        %v205 = vld [vmem:[#allocation5 + $0x50] sm:$0xff]
        %v206 = vld [vmem:[#allocation5 + $0x58] sm:$0xff]
        %v207 = vld [vmem:[#allocation5 + $0x60] sm:$0xff]
        %v208 = vld [vmem:[#allocation5 + $0x68] sm:$0xff]
        %v209 = vld [vmem:[#allocation5 + $0x70] sm:$0xff]
        %v210 = vld [vmem:[#allocation5 + $0x78] sm:$0xff]
        %211 = vmatprep.subr.mxu0 0.0
        %212 = vmatpush1.msra.mxu0 %v210
        %213 = vmatprep.subr.mxu0 0.0
        %214 = vmatpush1.msra.mxu0 %v209
        %215 = vmatprep.subr.mxu0 0.0
        %216 = vmatpush1.msra.mxu0 %v208
        %217 = vmatprep.subr.mxu0 0.0
        %218 = vmatpush1.msra.mxu0 %v207
        %219 = vmatprep.subr.mxu0 0.0
        %220 = vmatpush1.msra.mxu0 %v206
        %221 = vmatprep.subr.mxu0 0.0
        %222 = vmatpush1.msra.mxu0 %v205
        %223 = vmatprep.subr.mxu0 0.0
        %224 = vmatpush1.msra.mxu0 %v204
        %225 = vmatprep.subr.mxu0 0.0
        %226 = vmatpush1.msra.mxu0 %v203
        %227 = vmatprep.subr.mxu0 0.0
        %228 = vmatpush1.msra.mxu0 %v202
        %229 = vmatprep.subr.mxu0 0.0
        %230 = vmatpush1.msra.mxu0 %v201
        %231 = vmatprep.subr.mxu0 0.0
        %232 = vmatpush1.msra.mxu0 %v200
        %233 = vmatprep.subr.mxu0 0.0
        %234 = vmatpush1.msra.mxu0 %v199
        %235 = vmatprep.subr.mxu0 0.0
        %236 = vmatpush1.msra.mxu0 %v198
        %237 = vmatprep.subr.mxu0 0.0
        %238 = vmatpush1.msra.mxu0 %v197
        %239 = vmatprep.subr.mxu0 0.0
        %240 = vmatpush1.msra.mxu0 %v196
        %241 = vmatprep.subr.mxu0 0.0
        %242 = vmatpush1.msra.mxu0 %v195
        %243 = vmatprep.subr.mxu0 0.0
        %244 = vmatpush2.msra.mxu0 0.0
        %245 = vmatprep.subr.mxu0 0.0
        %246 = vmatpush2.msra.mxu0 0.0
        %247 = vmatprep.subr.mxu0 0.0
        %248 = vmatpush2.msra.mxu0 0.0
        %249 = vmatprep.subr.mxu0 0.0
        %250 = vmatpush2.msra.mxu0 0.0
        %251 = vmatprep.subr.mxu0 0.0
        %252 = vmatpush2.msra.mxu0 0.0
        %253 = vmatprep.subr.mxu0 0.0
        %254 = vmatpush2.msra.mxu0 0.0
        %255 = vmatprep.subr.mxu0 0.0
        %256 = vmatpush2.msra.mxu0 0.0
        %257 = vmatprep.subr.mxu0 0.0
        %258 = vmatpush2.msra.mxu0 0.0
        %259 = vmatprep.subr.mxu0 0.0
        %260 = vmatpush2.msra.mxu0 0.0
        %261 = vmatprep.subr.mxu0 0.0
        %262 = vmatpush2.msra.mxu0 0.0
        %263 = vmatprep.subr.mxu0 0.0
        %264 = vmatpush2.msra.mxu0 0.0
        %265 = vmatprep.subr.mxu0 0.0
        %266 = vmatpush2.msra.mxu0 0.0
        %267 = vmatprep.subr.mxu0 0.0
        %268 = vmatpush2.msra.mxu0 0.0
        %269 = vmatprep.subr.mxu0 0.0
        %270 = vmatpush2.msra.mxu0 0.0
        %271 = vmatprep.subr.mxu0 0.0
        %272 = vmatpush2.msra.mxu0 0.0
        %273 = vmatprep.subr.mxu0 0.0
        %274 = vmatpush2.msra.mxu0 0.0
        %275 = vmatprep.mubr.f32.mxu0 0.0
        %276 = vmatmul.mubr.f32.gmra.mxu0 %v179
        %v277 = vpop.f32.mrf.mxu0
        %v278 = vadd.f32 0.0, %v277
        %v279 = vpop.f32.mrf.mxu0
        %280 = vmatprep.mubr.f32.mxu0 0.0
        %281 = vmatmul.mubr.f32.gmra.mxu0 %v180
        %v282 = vpop.f32.mrf.mxu0
        %v283 = vadd.f32 0.0, %v282
        %v284 = vpop.f32.mrf.mxu0
        %285 = vmatprep.mubr.f32.mxu0 0.0
        %286 = vmatmul.mubr.f32.gmra.mxu0 %v181
        %v287 = vpop.f32.mrf.mxu0
        %v288 = vadd.f32 0.0, %v287
        %v289 = vpop.f32.mrf.mxu0
        %290 = vmatprep.mubr.f32.mxu0 0.0
        %291 = vmatmul.mubr.f32.gmra.mxu0 %v182
        %v292 = vpop.f32.mrf.mxu0
        %v293 = vadd.f32 0.0, %v292
        %v294 = vpop.f32.mrf.mxu0
        %295 = vmatprep.mubr.f32.mxu0 0.0
        %296 = vmatmul.mubr.f32.gmra.mxu0 %v183
        %v297 = vpop.f32.mrf.mxu0
        %v298 = vadd.f32 0.0, %v297
        %v299 = vpop.f32.mrf.mxu0
        %300 = vmatprep.mubr.f32.mxu0 0.0
        %301 = vmatmul.mubr.f32.gmra.mxu0 %v184
        %v302 = vpop.f32.mrf.mxu0
        %v303 = vadd.f32 0.0, %v302
        %v304 = vpop.f32.mrf.mxu0
        %305 = vmatprep.mubr.f32.mxu0 0.0
        %306 = vmatmul.mubr.f32.gmra.mxu0 %v185
        %v307 = vpop.f32.mrf.mxu0
        %v308 = vadd.f32 0.0, %v307
        %v309 = vpop.f32.mrf.mxu0
        %310 = vmatprep.mubr.f32.mxu0 0.0
        %311 = vmatmul.mubr.f32.gmra.mxu0 %v186
        %v312 = vpop.f32.mrf.mxu0
        %v313 = vadd.f32 0.0, %v312
        %v314 = vpop.f32.mrf.mxu0
        %315 = vmatprep.mubr.f32.mxu0 0.0
        %316 = vmatmul.mubr.f32.gmra.mxu0 %v187
        %v317 = vpop.f32.mrf.mxu0
        %v318 = vadd.f32 0.0, %v317
        %v319 = vpop.f32.mrf.mxu0
        %320 = vmatprep.mubr.f32.mxu0 0.0
        %321 = vmatmul.mubr.f32.gmra.mxu0 %v188
        %v322 = vpop.f32.mrf.mxu0
        %v323 = vadd.f32 0.0, %v322
        %v324 = vpop.f32.mrf.mxu0
        %325 = vmatprep.mubr.f32.mxu0 0.0
        %326 = vmatmul.mubr.f32.gmra.mxu0 %v189
        %v327 = vpop.f32.mrf.mxu0
        %v328 = vadd.f32 0.0, %v327
        %v329 = vpop.f32.mrf.mxu0
        %330 = vmatprep.mubr.f32.mxu0 0.0
        %331 = vmatmul.mubr.f32.gmra.mxu0 %v190
        %v332 = vpop.f32.mrf.mxu0
        %v333 = vadd.f32 0.0, %v332
        %v334 = vpop.f32.mrf.mxu0
        %335 = vmatprep.mubr.f32.mxu0 0.0
        %336 = vmatmul.mubr.f32.gmra.mxu0 %v191
        %v337 = vpop.f32.mrf.mxu0
        %v338 = vadd.f32 0.0, %v337
        %v339 = vpop.f32.mrf.mxu0
        %340 = vmatprep.mubr.f32.mxu0 0.0
        %341 = vmatmul.mubr.f32.gmra.mxu0 %v192
        %v342 = vpop.f32.mrf.mxu0
        %v343 = vadd.f32 0.0, %v342
        %v344 = vpop.f32.mrf.mxu0
        %345 = vmatprep.mubr.f32.mxu0 0.0
        %346 = vmatmul.mubr.f32.gmra.mxu0 %v193
        %v347 = vpop.f32.mrf.mxu0
        %v348 = vadd.f32 0.0, %v347
        %v349 = vpop.f32.mrf.mxu0
        %350 = vmatprep.mubr.f32.mxu0 0.0
        %351 = vmatmul.mubr.f32.gmra.mxu0 %v194
        %v352 = vpop.f32.mrf.mxu0
        %v353 = vadd.f32 0.0, %v352
        %v354 = vpop.f32.mrf.mxu0
        %355 = vdwg.mxu0
        %356 = vst [vmem:[%s176] sm:$0xff] %v278
        %357 = vst [vmem:[%s176 + $0x8] sm:$0xff] %v283
        %358 = vst [vmem:[%s176 + $0x10] sm:$0xff] %v288
        %359 = vst [vmem:[%s176 + $0x18] sm:$0xff] %v293
        %360 = vst [vmem:[%s176 + $0x20] sm:$0xff] %v298
        %361 = vst [vmem:[%s176 + $0x28] sm:$0xff] %v303
        %362 = vst [vmem:[%s176 + $0x30] sm:$0xff] %v308
        %363 = vst [vmem:[%s176 + $0x38] sm:$0xff] %v313
        %364 = vst [vmem:[%s176 + $0x40] sm:$0xff] %v318
        %365 = vst [vmem:[%s176 + $0x48] sm:$0xff] %v323
        %366 = vst [vmem:[%s176 + $0x50] sm:$0xff] %v328
        %367 = vst [vmem:[%s176 + $0x58] sm:$0xff] %v333
        %368 = vst [vmem:[%s176 + $0x60] sm:$0xff] %v338
        %369 = vst [vmem:[%s176 + $0x68] sm:$0xff] %v343
        %370 = vst [vmem:[%s176 + $0x70] sm:$0xff] %v348
        %371 = vst [vmem:[%s176 + $0x78] sm:$0xff] %v353
        %s372 = sand.u32 %s75, 1
        %s373 = scalar_lea.sflag [#allocation4], %s372
        %s374 = sand.u32 %s75, 1
        %s375 = smul.addr %s374, 128
        %s376 = scalar_lea.vmem [#allocation7], %s375
        // Predicated region
        $region37: #{tpu_custom_call.1} parent=27 // pred_check
          %p377 = pneg %p85
        $region38: #{tpu_custom_call.1} parent=27 // pred_check_branch
          %379 = sbr.rel (%p377) target = $region40
        $region39: #{tpu_custom_call.1} parent=27 // pred_region
          %s380 = smul.u32 16, %s20
          %s382 = ssub.s32 2048, 2048
          %383 = vsyncadd %s373, %s382
          %s384 = smul.addr %s380, 128
          %s385 = scalar_lea.hbm %s2, %s384
          %s386 = sshll.u32 %s376, 4
          %s387 = int_to_ptr.vmem [resolvable:$true] %s386
          %392 = dma.vmem_to_hbm [thread:$0]  %s387, 2048, %s385, %s373, 128, 128, 8
        $region40: #{tpu_custom_call.1} parent=27 // pred_fallthru
          _
      $region28: #{tpu_custom_call.1} parent=5 // pred_fallthru
        _
      %p393 = scmp.le.s32.totalorder 2, %s15
      // Predicated region
      $region41: #{tpu_custom_call.1} parent=5 // pred_check
        %p394 = pneg %p393
      $region42: #{tpu_custom_call.1} parent=5 // pred_check_branch
        %396 = sbr.rel (%p394) target = $region44
      $region43: #{tpu_custom_call.1} parent=5 // pred_region
        %s397 = ssub.s32 %s15, 2
        // Predicated region
        $region45: #{tpu_custom_call.1} parent=43 // pred_check
          %p398 = pneg %p91
        $region46: #{tpu_custom_call.1} parent=43 // pred_check_branch
          %400 = sbr.rel (%p398) target = $region48
        $region47: #{tpu_custom_call.1} parent=43 // pred_region
          %s401 = sand.u32 %s76, 1
          %s402 = scalar_lea.sflag [#allocation4], %s401
          %s403 = sand.u32 %s76, 1
          %s404 = smul.addr %s403, 128
          %s405 = scalar_lea.vmem [#allocation7], %s404
          %406 = dma.done %s402, 2048
        $region48: #{tpu_custom_call.1} parent=43 // pred_fallthru
          _
      $region44: #{tpu_custom_call.1} parent=5 // pred_fallthru
        _
    $region6: #{tpu_custom_call.1} parent=1 // loop_footer
      %s19 = sadd.s32 1, %s15
    $region7: #{tpu_custom_call.1} parent=1 // loop_footer_branch
      %14 = sbr.rel target = $region3
    $region8: #{tpu_custom_call.1} parent=1 // loop_exit
      _
    %407 = vsyncpa [#allocation3], 1
    %s408 = scalar_lea.sflag [#allocation3], 1
    %409 = vsyncpa %s408, 1
    %410 = vsyncpa [#allocation6], 1
    %411 = vsyncpa [#allocation4], 1
    %s412 = scalar_lea.sflag [#allocation4], 1
    %413 = vsyncpa %s412, 1

</llo_original>
